<compile_context>
chip_gen: v5e
topology: v5e:2x2
jax: 0.10.0
libtpu: 0.0.40
codegen_flags: <defaults>
</compile_context>

<pallas_src>
import math

import jax
import jax.numpy as jnp
from jax.experimental import pallas as pl
from jax.experimental.pallas import tpu as pltpu


def _round_up(a, b):
    return (a + b - 1) // b * b


# ----------------------------- kernels ------------------------------------ #

def _ffn_kernel_single(x_ref, w1_ref, b1_ref, w2_ref, b2_ref, o_ref):
    # x_ref: (tm, hid)  w1_ref: (hid, pf)  b1_ref: (1, pf)
    # w2_ref: (pf, hid) b2_ref: (1, hid)   o_ref: (tm, hid)
    h = jnp.dot(x_ref[...], w1_ref[...], preferred_element_type=jnp.float32)
    h = jnp.maximum(h + b1_ref[...], 0.0)
    # TODO(synk): training-mode dropout mask (pltpu.prng_random_bits) omitted;
    # nn.Dropout is identity at inference.
    y = jnp.dot(h.astype(w2_ref.dtype), w2_ref[...],
                preferred_element_type=jnp.float32)
    o_ref[...] = (y + b2_ref[...]).astype(o_ref.dtype)


def _ffn_kernel_chunked(x_ref, w1_ref, b1_ref, w2_ref, b2_ref, o_ref, acc_ref):
    # x_ref:  (tm, hid)   w1_ref: (hid, tpf)   b1_ref: (1, tpf)
    # w2_ref: (tpf, hid)  b2_ref: (1, hid)     o_ref:  (tm, hid)
    # acc_ref: (tm, hid) f32 scratch, resident across the pf-chunk axis.
    j = pl.program_id(1)

    @pl.when(j == 0)
    def _():
        acc_ref[...] = jnp.zeros_like(acc_ref)

    h = jnp.dot(x_ref[...], w1_ref[...], preferred_element_type=jnp.float32)
    h = jnp.maximum(h + b1_ref[...], 0.0)
    # TODO(synk): training-mode dropout mask omitted (identity at inference).
    acc_ref[...] += jnp.dot(h.astype(w2_ref.dtype), w2_ref[...],
                            preferred_element_type=jnp.float32)

    @pl.when(j == pl.num_programs(1) - 1)
    def _():
        o_ref[...] = (acc_ref[...] + b2_ref[...]).astype(o_ref.dtype)


# ----------------------------- wrapper ------------------------------------ #

def _pick_tpf(pf, hid, tm, w_itemsize, budget_bytes=24 * 2**20):
    """Largest lane-aligned (x128) divisor of pf whose per-chunk footprint fits."""
    if pf % 128 != 0:
        return pf  # cannot chunk on lane-aligned boundaries; single chunk

    def footprint(t):
        return (2 * (hid * t + t * hid) * w_itemsize   # double-buffered w1 + w2 chunks
                + 2 * t * w_itemsize                    # b1 chunk (double-buffered)
                + tm * t * 4)                           # f32 h intermediate

    cand = [d for d in range(128, pf + 1, 128) if pf % d == 0]
    fitting = [d for d in cand if footprint(d) <= budget_bytes]
    if fitting:
        return max(fitting)
    return min(cand)  # nothing fits: smallest lane-aligned chunk, best effort


def positionwise_ffn(x, w1, b1, w2, b2, *, tm=256, tpf=None):
    """x: [batch, seq, hid].  w1: [hid, pf], b1: [pf], w2: [pf, hid], b2: [hid]."""
    batch, seq, hid = x.shape
    hid_w, pf = w1.shape
    assert hid_w == hid
    M = batch * seq

    x_bytes = x.dtype.itemsize
    w_bytes = w1.dtype.itemsize

    # Row tile: multiple of 8 (sublane), no larger than the padded token count.
    tm_eff = max(8, min(int(tm), _round_up(M, 8)))
    tm_eff = _round_up(tm_eff, 8)
    Mp = _round_up(M, tm_eff)

    # pf chunk: either caller-provided (validated) or auto-picked under a VMEM budget.
    if tpf is not None and pf % int(tpf) == 0 and int(tpf) % 128 == 0:
        tpf_eff = int(tpf)
    elif tpf is not None:
        tpf_eff = pf
    else:
        tpf_eff = _pick_tpf(pf, hid, tm_eff, w_bytes)
    n_pf = pf // tpf_eff

    x2d = x.reshape(M, hid)
    if Mp != M:
        x2d = jnp.pad(x2d, ((0, Mp - M), (0, 0)))
    b1_2d = b1.reshape(1, pf)
    b2_2d = b2.reshape(1, hid)

    const_mode = pl.Buffered(1)  # block index never changes -> single-buffer

    if n_pf == 1:
        # Fused single-chunk path: no accumulator scratch, 1-D grid.
        grid = (Mp // tm_eff,)
        in_specs = [
            pl.BlockSpec((tm_eff, hid), lambda i: (i, 0)),                          # x tile
            pl.BlockSpec((hid, pf), lambda i: (0, 0), pipeline_mode=const_mode),    # w1
            pl.BlockSpec((1, pf), lambda i: (0, 0), pipeline_mode=const_mode),      # b1
            pl.BlockSpec((pf, hid), lambda i: (0, 0), pipeline_mode=const_mode),    # w2
            pl.BlockSpec((1, hid), lambda i: (0, 0), pipeline_mode=const_mode),     # b2
        ]
        out_spec = pl.BlockSpec((tm_eff, hid), lambda i: (i, 0))
        scratch_shapes = []
        kernel = _ffn_kernel_single
        dim_sem = ("parallel",)
        vmem_est = (
            2 * (tm_eff * hid * x_bytes) * 2                # x + out tiles, double-buffered
            + (hid * pf + pf * hid) * w_bytes               # w1 + w2 (single-buffered)
            + (pf + hid) * w_bytes                          # biases
            + tm_eff * pf * 4                               # f32 h intermediate
            + tm_eff * hid * 4                              # f32 result temp
        )
    else:
        grid = (Mp // tm_eff, n_pf)
        w_mode = pl.Buffered(2)
        in_specs = [
            pl.BlockSpec((tm_eff, hid), lambda i, j: (i, 0)),                           # x tile
            pl.BlockSpec((hid, tpf_eff), lambda i, j: (0, j), pipeline_mode=w_mode),    # w1 chunk
            pl.BlockSpec((1, tpf_eff), lambda i, j: (0, j), pipeline_mode=w_mode),      # b1 chunk
            pl.BlockSpec((tpf_eff, hid), lambda i, j: (j, 0), pipeline_mode=w_mode),    # w2 chunk
            pl.BlockSpec((1, hid), lambda i, j: (0, 0), pipeline_mode=const_mode),      # b2
        ]
        out_spec = pl.BlockSpec((tm_eff, hid), lambda i, j: (i, 0))
        scratch_shapes = [pltpu.VMEM((tm_eff, hid), jnp.float32)]
        kernel = _ffn_kernel_chunked
        dim_sem = ("parallel", "arbitrary")
        vmem_est = (
            2 * (tm_eff * hid * x_bytes) * 2                            # x + out tiles
            + (hid * tpf_eff + tpf_eff * hid) * w_bytes * 2             # w1 + w2 chunks (db)
            + (tpf_eff * 2 + hid) * w_bytes                             # biases
            + tm_eff * hid * 4                                          # f32 accumulator
            + tm_eff * tpf_eff * 4                                      # f32 h intermediate
        )

    vmem_limit = int(min(64 * 2**20, max(2 * vmem_est, 16 * 2**20)))

    cost = pl.CostEstimate(
        flops=int(4 * M * hid * pf),                       # two matmuls
        transcendentals=0,
        bytes_accessed=int(2 * M * hid * x_bytes
                           + 2 * hid * pf * w_bytes
                           + (pf + hid) * w_bytes),
    )

    out2d = pl.pallas_call(
        kernel,
        out_shape=jax.ShapeDtypeStruct((Mp, hid), x.dtype),
        grid_spec=pltpu.PrefetchScalarGridSpec(
            num_scalar_prefetch=0,
            grid=grid,
            in_specs=in_specs,
            out_specs=out_spec,
            scratch_shapes=scratch_shapes,
        ),
        compiler_params=pltpu.CompilerParams(
            dimension_semantics=dim_sem,
            vmem_limit_bytes=vmem_limit,
        ),
        cost_estimate=cost,
    )(x2d, w1, b1_2d, w2, b2_2d)

    if Mp != M:
        out2d = out2d[:M]
    return out2d.reshape(batch, seq, hid)


# ----------------------------- reference / test ---------------------------- #

def _reference(x, w1, b1, w2, b2):
    hi = jax.lax.Precision.HIGHEST
    h = jnp.maximum(jnp.einsum("bsh,hp->bsp", x, w1, precision=hi) + b1, 0.0)
    return jnp.einsum("bsp,ph->bsh", h, w2, precision=hi) + b2


def _make_params(key, hid_dim, pf_dim):
    kw1, kb1, kw2, kb2 = jax.random.split(key, 4)
    lim1 = 1.0 / math.sqrt(hid_dim)
    lim2 = 1.0 / math.sqrt(pf_dim)
    w1 = jax.random.uniform(kw1, (hid_dim, pf_dim), jnp.float32, -lim1, lim1)
    b1 = jax.random.uniform(kb1, (pf_dim,), jnp.float32, -lim1, lim1)
    w2 = jax.random.uniform(kw2, (pf_dim, hid_dim), jnp.float32, -lim2, lim2)
    b2 = jax.random.uniform(kb2, (hid_dim,), jnp.float32, -lim2, lim2)
    return w1, b1, w2, b2


if __name__ == "__main__":
    key = jax.random.PRNGKey(0)

    # 1) Module-consistent small shapes (single pf chunk, single row tile).
    batch, seq, hid_dim, pf_dim = 2, 8, 32, 64
    k0, k1, k2, k3 = jax.random.split(key, 4)
    x = jax.random.normal(k0, (batch, seq, hid_dim), dtype=jnp.float32)
    w1, b1, w2, b2 = _make_params(k1, hid_dim, pf_dim)
    out = jax.block_until_ready(positionwise_ffn(x, w1, b1, w2, b2))
    ref = _reference(x, w1, b1, w2, b2)
    assert out.shape == (batch, seq, hid_dim)
    assert jnp.allclose(out, ref, atol=1e-4, rtol=1e-4), "mismatch vs reference (case 1)"

    # 2) Ragged token count -> exercises the pad / slice-back path.
    xr = jax.random.normal(k2, (3, 5, hid_dim), dtype=jnp.float32)
    outr = jax.block_until_ready(positionwise_ffn(xr, w1, b1, w2, b2))
    refr = _reference(xr, w1, b1, w2, b2)
    assert jnp.allclose(outr, refr, atol=1e-4, rtol=1e-4), "mismatch vs reference (case 2)"

    # 3) Lane-aligned dims with forced pf chunking -> exercises the accumulator path.
    hid_l, pf_l = 128, 256
    xl = jax.random.normal(k3, (2, 8, hid_l), dtype=jnp.float32)
    w1l, b1l, w2l, b2l = _make_params(k1, hid_l, pf_l)
    outl = jax.block_until_ready(
        positionwise_ffn(xl, w1l, b1l, w2l, b2l, tm=256, tpf=128))
    refl = _reference(xl, w1l, b1l, w2l, b2l)
    assert jnp.allclose(outl, refl, atol=1e-4, rtol=1e-4), "mismatch vs reference (case 3)"

    # 4) Auto tpf selection (lane-aligned pf, tpf=None -> picks a single fused chunk here).
    outa = jax.block_until_ready(positionwise_ffn(xl, w1l, b1l, w2l, b2l, tm=128))
    assert jnp.allclose(outa, refl, atol=1e-4, rtol=1e-4), "mismatch vs reference (case 4)"

    print("KERNEL_OK")
</pallas_src>

<mosaic_0001>
module attributes {stable_mosaic.version = 11 : i64} {
  func.func @_ffn_kernel_single(%arg0: i32, %arg1: memref<16x32xf32, #tpu.memory_space<vmem>>, %arg2: memref<32x64xf32, #tpu.memory_space<vmem>>, %arg3: memref<1x64xf32, #tpu.memory_space<vmem>>, %arg4: memref<64x32xf32, #tpu.memory_space<vmem>>, %arg5: memref<1x32xf32, #tpu.memory_space<vmem>>, %arg6: memref<16x32xf32, #tpu.memory_space<vmem>>) attributes {dimension_semantics = [#tpu.dimension_semantics<parallel>], iteration_bounds = array<i64: 1>, scalar_prefetch = 0 : i64, scratch_operands = 0 : i64, tpu.core_type = #tpu.core_type<tc>, window_params = [{transform_indices = @transform_0, window_bounds = array<i64: 16, 32>}, {pipeline_mode = #tpu.pipeline_mode<synchronous>, transform_indices = @transform_1, window_bounds = array<i64: 32, 64>}, {pipeline_mode = #tpu.pipeline_mode<synchronous>, transform_indices = @transform_2, window_bounds = array<i64: 1, 64>}, {pipeline_mode = #tpu.pipeline_mode<synchronous>, transform_indices = @transform_3, window_bounds = array<i64: 64, 32>}, {pipeline_mode = #tpu.pipeline_mode<synchronous>, transform_indices = @transform_4, window_bounds = array<i64: 1, 32>}, {transform_indices = @transform_5, window_bounds = array<i64: 16, 32>}]} {
    %c0 = arith.constant 0 : index
    %c0_0 = arith.constant 0 : index
    %0 = vector.load %arg1[%c0, %c0_0] : memref<16x32xf32, #tpu.memory_space<vmem>>, vector<16x32xf32>
    %c0_1 = arith.constant 0 : index
    %c0_2 = arith.constant 0 : index
    %1 = vector.load %arg2[%c0_1, %c0_2] : memref<32x64xf32, #tpu.memory_space<vmem>>, vector<32x64xf32>
    %cst = arith.constant dense<0.000000e+00> : vector<16x64xf32>
    %2 = tpu.matmul %0, %1, %cst {dimension_numbers = #tpu.dot_dimension_numbers<[1], [0], [0], [1], [0, 0, 1, 1], [], []>} : vector<16x32xf32>, vector<32x64xf32>, vector<16x64xf32> -> vector<16x64xf32>
    %c0_3 = arith.constant 0 : index
    %c0_4 = arith.constant 0 : index
    %3 = vector.load %arg3[%c0_3, %c0_4] : memref<1x64xf32, #tpu.memory_space<vmem>>, vector<1x64xf32>
    %4 = vector.broadcast %3 : vector<1x64xf32> to vector<16x64xf32>
    %5 = arith.addf %2, %4 : vector<16x64xf32>
    %cst_5 = arith.constant 0.000000e+00 : f32
    %6 = vector.broadcast %cst_5 : f32 to vector<16x64xf32>
    %7 = arith.maximumf %5, %6 : vector<16x64xf32>
    %c0_6 = arith.constant 0 : index
    %c0_7 = arith.constant 0 : index
    %8 = vector.load %arg4[%c0_6, %c0_7] : memref<64x32xf32, #tpu.memory_space<vmem>>, vector<64x32xf32>
    %cst_8 = arith.constant dense<0.000000e+00> : vector<16x32xf32>
    %9 = tpu.matmul %7, %8, %cst_8 {dimension_numbers = #tpu.dot_dimension_numbers<[1], [0], [0], [1], [0, 0, 1, 1], [], []>} : vector<16x64xf32>, vector<64x32xf32>, vector<16x32xf32> -> vector<16x32xf32>
    %c0_9 = arith.constant 0 : index
    %c0_10 = arith.constant 0 : index
    %10 = vector.load %arg5[%c0_9, %c0_10] : memref<1x32xf32, #tpu.memory_space<vmem>>, vector<1x32xf32>
    %11 = vector.broadcast %10 : vector<1x32xf32> to vector<16x32xf32>
    %12 = arith.addf %9, %11 : vector<16x32xf32>
    %c0_11 = arith.constant 0 : index
    %c0_12 = arith.constant 0 : index
    %13 = vector.load %arg6[%c0_11, %c0_12] : memref<16x32xf32, #tpu.memory_space<vmem>>, vector<16x32xf32>
    tpu.vector_store %arg6[%c0_11, %c0_12], %12 {strides = array<i32>} : memref<16x32xf32, #tpu.memory_space<vmem>>, vector<16x32xf32>,
    return
  }
  func.func @transform_0(%arg0: i32) -> (i32, i32) {
    %c0_i32 = arith.constant 0 : i32
    %c0_i32_0 = arith.constant 0 : i32
    return %arg0, %c0_i32 : i32, i32
  }
  func.func @transform_1(%arg0: i32) -> (i32, i32) {
    %c0_i32 = arith.constant 0 : i32
    %c0_i32_0 = arith.constant 0 : i32
    %c0_i32_1 = arith.constant 0 : i32
    return %c0_i32, %c0_i32_0 : i32, i32
  }
  func.func @transform_2(%arg0: i32) -> (i32, i32) {
    %c0_i32 = arith.constant 0 : i32
    %c0_i32_0 = arith.constant 0 : i32
    %c0_i32_1 = arith.constant 0 : i32
    return %c0_i32, %c0_i32_0 : i32, i32
  }
  func.func @transform_3(%arg0: i32) -> (i32, i32) {
    %c0_i32 = arith.constant 0 : i32
    %c0_i32_0 = arith.constant 0 : i32
    %c0_i32_1 = arith.constant 0 : i32
    return %c0_i32, %c0_i32_0 : i32, i32
  }
  func.func @transform_4(%arg0: i32) -> (i32, i32) {
    %c0_i32 = arith.constant 0 : i32
    %c0_i32_0 = arith.constant 0 : i32
    %c0_i32_1 = arith.constant 0 : i32
    return %c0_i32, %c0_i32_0 : i32, i32
  }
  func.func @transform_5(%arg0: i32) -> (i32, i32) {
    %c0_i32 = arith.constant 0 : i32
    %c0_i32_0 = arith.constant 0 : i32
    return %arg0, %c0_i32 : i32, i32
  }
}

</mosaic_0001>

<llo_original>
// kernel: tpu_custom_call.1
$region0: #{tpu_custom_call.1}
  #allocation0 [shape = 'u32[]', space=smem, size = 0x4, offset = 0x4, fixed_abs, tag = 'smem constant byte address 0x4 - core index']
  #allocation1 [shape = 'u32[72,128]{1,0:T(1,128)}', space=vmem, size = 0x9000, scoped, tag = 'internal scratch']
  %s0 = inlined_call_operand.vmem [shape: f32[16,32], index: 0, kind: input, shape index: {}]
  %s1 = inlined_call_operand.vmem [shape: f32[32,64], index: 1, kind: input, shape index: {}]
  %s2 = inlined_call_operand.vmem [shape: f32[1,64], index: 2, kind: input, shape index: {}]
  %s3 = inlined_call_operand.vmem [shape: f32[64,32], index: 3, kind: input, shape index: {}]
  %s4 = inlined_call_operand.vmem [shape: f32[1,32], index: 4, kind: input, shape index: {}]
  %s5 = inlined_call_operand.hbm [shape: f32[16,32], index: 5, kind: output, shape index: {}]
  %s6 = sld [smem:[#allocation0]]
  $region30: #{tpu_custom_call.1} parent=0
    _
  %s8 = ssub.s32 1, %s6
  %s9 = scalar_select 0, %s8, %s6
  $region1: #{tpu_custom_call.1} parent=0
    #allocation2 [shape = 'u8[8192]{0}', space=vmem, size = 0x2000, scoped, tag = 'output window, operand 0, single buffered']
    #allocation3 [shape = 's32[1]{0}', space=sflag, size = 0x4, scoped, tag = 'scoped memory for tpu_custom_call.1']
    %10 = vsyncpa [#allocation3], 0
    // Predicated region
    $region2: #{tpu_custom_call.1} parent=1 // pred_check
      _
    $region3: #{tpu_custom_call.1} parent=1 // pred_check_branch
      %12 = sbr.rel (0) target = $region5
    $region4: #{tpu_custom_call.1} parent=1 // pred_region
      _
    $region5: #{tpu_custom_call.1} parent=1 // pred_fallthru
      _
    // Predicated region
    $region6: #{tpu_custom_call.1} parent=1 // pred_check
      _
    $region7: #{tpu_custom_call.1} parent=1 // pred_check_branch
      %14 = sbr.rel (0) target = $region9
    $region8: #{tpu_custom_call.1} parent=1 // pred_region
      _
    $region9: #{tpu_custom_call.1} parent=1 // pred_fallthru
      _
    // Predicated region
    $region10: #{tpu_custom_call.1} parent=1 // pred_check
      _
    $region11: #{tpu_custom_call.1} parent=1 // pred_check_branch
      %16 = sbr.rel (0) target = $region13
    $region12: #{tpu_custom_call.1} parent=1 // pred_region
      _
    $region13: #{tpu_custom_call.1} parent=1 // pred_fallthru
      _
    // Predicated region
    $region14: #{tpu_custom_call.1} parent=1 // pred_check
      _
    $region15: #{tpu_custom_call.1} parent=1 // pred_check_branch
      %18 = sbr.rel (0) target = $region17
    $region16: #{tpu_custom_call.1} parent=1 // pred_region
      _
    $region17: #{tpu_custom_call.1} parent=1 // pred_fallthru
      _
    // Predicated region
    $region18: #{tpu_custom_call.1} parent=1 // pred_check
      _
    $region19: #{tpu_custom_call.1} parent=1 // pred_check_branch
      %20 = sbr.rel (0) target = $region21
    $region20: #{tpu_custom_call.1} parent=1 // pred_region
      _
    $region21: #{tpu_custom_call.1} parent=1 // pred_fallthru
      _
    %v21 = vld [vmem:[%s0] sm:$0xff]
    %v22 = vld [vmem:[%s0 + $0x8] sm:$0xff]
    %v23 = vld [vmem:[%s1] sm:$0xff]
    %v24 = vld [vmem:[%s1 + $0x8] sm:$0xff]
    %v25 = vld [vmem:[%s1 + $0x10] sm:$0xff]
    %v26 = vld [vmem:[%s1 + $0x18] sm:$0xff]
    %v27 = vld [vmem:[%s2] sm:$0x1]
    %v29 = vperm.slane %v27, 0
    %vm31 = vcmask 261120
    %v33 = vsel %vm31, %v21, 0
    %v36 = vsel %vm31, %v22, 0
    %38 = vmatpush.msra.mxu0 0.0
    %39 = vmatpush.msra.mxu0 0.0
    %40 = vmatpush.msra.mxu0 0.0
    %41 = vmatpush.msra.mxu0 0.0
    %42 = vmatpush.msra.mxu0 0.0
    %43 = vmatpush.msra.mxu0 0.0
    %44 = vmatpush.msra.mxu0 0.0
    %45 = vmatpush.msra.mxu0 0.0
    %46 = vmatpush.msra.mxu0 0.0
    %47 = vmatpush.msra.mxu0 0.0
    %48 = vmatpush.msra.mxu0 0.0
    %49 = vmatpush.msra.mxu0 0.0
    %50 = vmatpush.msra.mxu0 %v26
    %51 = vmatpush.msra.mxu0 %v25
    %52 = vmatpush.msra.mxu0 %v24
    %53 = vmatpush.msra.mxu0 %v23
    %54 = vmatmul.f32.gmra.mxu0 %v33
    %v55 = vpop.f32.mrf.mxu0
    %v56 = vadd.f32 %v29, %v55
    %57 = vmatmul.f32.gmra.mxu0 %v36
    %v58 = vpop.f32.mrf.mxu0
    %v59 = vadd.f32 %v29, %v58
    %60 = vdwg.mxu0
    %v61 = vmax.f32 %v56, 0.0
    %v62 = vmax.f32 %v59, 0.0
    %v63 = vld [vmem:[%s3] sm:$0xff]
    %v64 = vld [vmem:[%s3 + $0x8] sm:$0xff]
    %v65 = vld [vmem:[%s3 + $0x10] sm:$0xff]
    %v66 = vld [vmem:[%s3 + $0x18] sm:$0xff]
    %v67 = vld [vmem:[%s3 + $0x20] sm:$0xff]
    %v68 = vld [vmem:[%s3 + $0x28] sm:$0xff]
    %v69 = vld [vmem:[%s3 + $0x30] sm:$0xff]
    %v70 = vld [vmem:[%s3 + $0x38] sm:$0xff]
    %v71 = vld [vmem:[%s4] sm:$0x1]
    %v73 = vperm.slane %v71, 0
    %vm75 = vcmask 523264
    %v77 = vsel %vm75, %v61, 0
    %v80 = vsel %vm75, %v62, 0
    %82 = vmatpush.msra.mxu0 0.0
    %83 = vmatpush.msra.mxu0 0.0
    %84 = vmatpush.msra.mxu0 0.0
    %85 = vmatpush.msra.mxu0 0.0
    %86 = vmatpush.msra.mxu0 0.0
    %87 = vmatpush.msra.mxu0 0.0
    %88 = vmatpush.msra.mxu0 0.0
    %89 = vmatpush.msra.mxu0 0.0
    %90 = vmatpush.msra.mxu0 %v70
    %91 = vmatpush.msra.mxu0 %v69
    %92 = vmatpush.msra.mxu0 %v68
    %93 = vmatpush.msra.mxu0 %v67
    %94 = vmatpush.msra.mxu0 %v66
    %95 = vmatpush.msra.mxu0 %v65
    %96 = vmatpush.msra.mxu0 %v64
    %97 = vmatpush.msra.mxu0 %v63
    %98 = vmatmul.f32.gmra.mxu0 %v77
    %v99 = vpop.f32.mrf.mxu0
    %v100 = vadd.f32 %v73, %v99
    %101 = vmatmul.f32.gmra.mxu0 %v80
    %v102 = vpop.f32.mrf.mxu0
    %v103 = vadd.f32 %v73, %v102
    %104 = vdwg.mxu0
    %105 = vst.msk [vmem:[#allocation2] sm:$0xff] %vm31, %v100
    %106 = vst.msk [vmem:[#allocation2 + $0x8] sm:$0xff] %vm31, %v103
    // Predicated region
    $region22: #{tpu_custom_call.1} parent=1 // pred_check
      _
    $region23: #{tpu_custom_call.1} parent=1 // pred_check_branch
      %108 = sbr.rel (0) target = $region25
    $region24: #{tpu_custom_call.1} parent=1 // pred_region
      %110 = vsyncadd [#allocation3], 0
      %s111 = sshll.u32 [#allocation2], 4
      %s112 = int_to_ptr.vmem [resolvable:$true] %s111
      %s113 = sshll.u32 %s5, 4
      %s114 = int_to_ptr.hbm [resolvable:$true] %s113
      %119 = dma.vmem_to_hbm [thread:$0]  %s112, 256, %s114, [#allocation3], 128, 128, 8
    $region25: #{tpu_custom_call.1} parent=1 // pred_fallthru
      _
    // Predicated region
    $region26: #{tpu_custom_call.1} parent=1 // pred_check
      _
    $region27: #{tpu_custom_call.1} parent=1 // pred_check_branch
      %121 = sbr.rel (0) target = $region29
    $region28: #{tpu_custom_call.1} parent=1 // pred_region
      %123 = dma.done [#allocation3], 256
    $region29: #{tpu_custom_call.1} parent=1 // pred_fallthru
      _
    %124 = vsyncpa [#allocation3], 1

</llo_original>
